<compile_context>
chip_gen: v7x
topology: tpu7x:2x2x1
jax: 0.10.0
libtpu: 0.0.40
codegen_flags: <defaults>
</compile_context>

<pallas_src>
import functools

import jax
import jax.numpy as jnp
from jax import lax
from jax.experimental import pallas as pl
from jax.experimental.pallas import tpu as pltpu

SEED_PAD = 8     # seed (3 chans) zero-padded to 8 lanes for a clean K=8 dot
OUT_PAD = 128    # final conv outputs zero-padded to 128 lanes (lane-dense vst)


def _round_up(a, b):
    return (a + b - 1) // b * b


def _subfold_kernel(feat_ref, seed_ref,
                    w1f_ref, w1s_ref, b1_ref, w2_ref, b2_ref, w3_ref, b3_ref,
                    w4f_ref, w4s_ref, b4_ref, w5_ref, b5_ref, w6_ref, b6_ref,
                    o_ref):
    feat = feat_ref[...]          # (tm, C)        bf16
    seed = seed_ref[...]          # (tm, SEED_PAD) bf16, lanes 3.. are zero

    # ---------------- folding1 ----------------
    h = jnp.dot(feat, w1f_ref[...], preferred_element_type=jnp.float32)
    h = h + jnp.dot(seed, w1s_ref[...], preferred_element_type=jnp.float32)
    h = jnp.maximum(h + b1_ref[...], 0.0)                     # conv1+BN1+ReLU
    h = jnp.dot(h.astype(w2_ref.dtype), w2_ref[...],
                preferred_element_type=jnp.float32)
    h = jnp.maximum(h + b2_ref[...], 0.0)                     # conv2+BN2+ReLU
    fd1 = jnp.dot(h.astype(w3_ref.dtype), w3_ref[...],
                  preferred_element_type=jnp.float32) + b3_ref[...]
    # fd1: (tm, OUT_PAD); columns 3.. are exactly zero (zero-padded W3/b3).

    # ---------------- folding2 ----------------
    g = jnp.dot(feat, w4f_ref[...], preferred_element_type=jnp.float32)
    g = g + jnp.dot(fd1.astype(w4s_ref.dtype), w4s_ref[...],
                    preferred_element_type=jnp.float32)
    g = jnp.maximum(g + b4_ref[...], 0.0)
    g = jnp.dot(g.astype(w5_ref.dtype), w5_ref[...],
                preferred_element_type=jnp.float32)
    g = jnp.maximum(g + b5_ref[...], 0.0)
    fd2 = jnp.dot(g.astype(w6_ref.dtype), w6_ref[...],
                  preferred_element_type=jnp.float32) + b6_ref[...]

    o_ref[...] = fd2.astype(o_ref.dtype)


@functools.partial(jax.jit, static_argnames=("tm",))
def subfold_pallas(x, c, params, *, tm=256):
    """x: (bs, in_channel) [or (bs, in_channel, 1)], c: (bs, 3, step*step).

    Returns fd2: (bs, 3, step*step), matching SubFold.forward.
    """
    bs = x.shape[0]
    x2 = x.reshape(bs, -1)                      # (bs, C)
    C = x2.shape[1]
    num_sample = c.shape[2]
    M = bs * num_sample

    # features broadcast per point; seed transposed to tokens-major.
    feat = jnp.broadcast_to(x2[:, None, :], (bs, num_sample, C)).reshape(M, C)
    seed = jnp.transpose(c, (0, 2, 1)).reshape(M, 3)
    feat = feat.astype(jnp.bfloat16)
    seed = jnp.pad(seed, ((0, 0), (0, SEED_PAD - 3))).astype(jnp.bfloat16)

    # Token tile: big by default, clamped/rounded to 8 sublanes; ragged M is
    # handled by zero-padding (pad rows are computed but sliced away).
    tm_eff = _round_up(max(8, min(tm, _round_up(M, 8))), 8)
    Mp = _round_up(M, tm_eff)
    if Mp != M:
        feat = jnp.pad(feat, ((0, Mp - M), (0, 0)))
        seed = jnp.pad(seed, ((0, Mp - M), (0, 0)))

    p = params
    H = p["w1f"].shape[1]
    H2 = p["w2"].shape[1]

    flops = 2 * Mp * (C * H + SEED_PAD * H + H * H2 + H2 * OUT_PAD
                      + C * H + OUT_PAD * H + H * H2 + H2 * OUT_PAD)
    weight_bytes = sum(int(v.size) * v.dtype.itemsize for v in p.values())
    bytes_accessed = int(feat.size) * 2 + int(seed.size) * 2 \
        + Mp * OUT_PAD * 4 + weight_bytes

    def resident(shape):  # whole-array weight/bias block, constant index
        return pl.BlockSpec(shape, lambda i: (0,) * len(shape))

    grid_spec = pltpu.PrefetchScalarGridSpec(
        num_scalar_prefetch=0,
        grid=(Mp // tm_eff,),
        in_specs=[
            pl.BlockSpec((tm_eff, C), lambda i: (i, 0)),         # feat tile
            pl.BlockSpec((tm_eff, SEED_PAD), lambda i: (i, 0)),  # seed tile
            # folding1 (BN folded into convs in the wrapper)
            resident((C, H)), resident((SEED_PAD, H)), resident((1, H)),
            resident((H, H2)), resident((1, H2)),
            resident((H2, OUT_PAD)), resident((1, OUT_PAD)),
            # folding2
            resident((C, H)), resident((OUT_PAD, H)), resident((1, H)),
            resident((H, H2)), resident((1, H2)),
            resident((H2, OUT_PAD)), resident((1, OUT_PAD)),
        ],
        out_specs=pl.BlockSpec((tm_eff, OUT_PAD), lambda i: (i, 0)),
    )

    out2 = pl.pallas_call(
        _subfold_kernel,
        out_shape=jax.ShapeDtypeStruct((Mp, OUT_PAD), jnp.float32),
        grid_spec=grid_spec,
        compiler_params=pltpu.CompilerParams(
            dimension_semantics=("parallel",)),
        cost_estimate=pl.CostEstimate(
            flops=flops, transcendentals=0, bytes_accessed=bytes_accessed),
    )(feat, seed,
      p["w1f"], p["w1s"], p["b1"], p["w2"], p["b2"], p["w3"], p["b3"],
      p["w4f"], p["w4s"], p["b4"], p["w5"], p["b5"], p["w6"], p["b6"])

    fd2 = out2[:M, :3].reshape(bs, num_sample, 3)
    return jnp.transpose(fd2, (0, 2, 1))        # (bs, 3, num_sample)


# ---------------------------------------------------------------------------
# Parameter construction / BN folding / packing
# ---------------------------------------------------------------------------
def init_subfold_params(key, in_channel, hidden_dim, dtype=jnp.float32):
    """Deterministic synthetic SubFold params.

    Conv1d(k=1) weights are stored transposed as (in, out); BN params are
    (gamma, beta, running_mean, running_var). The input-channel order of each
    folding's first conv matches the PyTorch concat: [3 seed/fd, in_channel].
    """
    def conv(k, cin, cout):
        kw, kb = jax.random.split(k)
        s = cin ** -0.5
        w = jax.random.uniform(kw, (cin, cout), dtype, -s, s)
        b = jax.random.uniform(kb, (cout,), dtype, -s, s)
        return w, b

    def bn(k, cdim):
        kg, kb, km, kv = jax.random.split(k, 4)
        gamma = jax.random.uniform(kg, (cdim,), dtype, 0.5, 1.5)
        beta = jax.random.uniform(kb, (cdim,), dtype, -0.5, 0.5)
        mean = jax.random.uniform(km, (cdim,), dtype, -0.5, 0.5)
        var = jax.random.uniform(kv, (cdim,), dtype, 0.5, 1.5)
        return gamma, beta, mean, var

    H, H2, Cin = hidden_dim, hidden_dim // 2, in_channel + 3
    keys = jax.random.split(key, 10)

    def folding(ks):
        return dict(conv1=conv(ks[0], Cin, H), bn1=bn(ks[1], H),
                    conv2=conv(ks[2], H, H2), bn2=bn(ks[3], H2),
                    conv3=conv(ks[4], H2, 3))

    return dict(folding1=folding(keys[:5]), folding2=folding(keys[5:]))


def fold_and_pack_params(raw, weight_dtype=jnp.bfloat16, eps=1e-5):
    """Fold BN into the 1x1 convs, split the concat matmuls, pad for TPU."""
    # TODO(synk): BatchNorm is folded with eval-mode (running) statistics; training-mode batch statistics are not reproduced in the kernel.
    def fold(conv_p, bn_p):
        w, b = conv_p
        gamma, beta, mean, var = bn_p
        scale = gamma / jnp.sqrt(var + eps)
        return w * scale[None, :], (b - mean) * scale + beta

    def pack(fp, lead_rows):
        w1, b1 = fold(fp["conv1"], fp["bn1"])
        w2, b2 = fold(fp["conv2"], fp["bn2"])
        w3, b3 = fp["conv3"]
        ws = jnp.pad(w1[:3], ((0, lead_rows - 3), (0, 0)))   # seed / fd rows
        wf = w1[3:]                                          # feature rows
        w3p = jnp.pad(w3, ((0, 0), (0, OUT_PAD - 3)))        # lane-dense out
        b3p = jnp.pad(b3, (0, OUT_PAD - 3))
        return (wf.astype(weight_dtype), ws.astype(weight_dtype),
                b1.reshape(1, -1).astype(jnp.float32),
                w2.astype(weight_dtype),
                b2.reshape(1, -1).astype(jnp.float32),
                w3p.astype(weight_dtype),
                b3p.reshape(1, -1).astype(jnp.float32))

    w1f, w1s, b1, w2, b2, w3, b3 = pack(raw["folding1"], SEED_PAD)
    w4f, w4s, b4, w5, b5, w6, b6 = pack(raw["folding2"], OUT_PAD)
    return dict(w1f=w1f, w1s=w1s, b1=b1, w2=w2, b2=b2, w3=w3, b3=b3,
                w4f=w4f, w4s=w4s, b4=b4, w5=w5, b5=b5, w6=w6, b6=b6)


# ---------------------------------------------------------------------------
# Pure-JAX reference with the same bf16-input / f32-accumulate semantics
# ---------------------------------------------------------------------------
def subfold_ref(x, c, packed):
    bs = x.shape[0]
    x2 = x.reshape(bs, -1)
    C = x2.shape[1]
    num_sample = c.shape[2]
    M = bs * num_sample
    feat = jnp.broadcast_to(x2[:, None, :], (bs, num_sample, C)).reshape(M, C)
    seed = jnp.pad(jnp.transpose(c, (0, 2, 1)).reshape(M, 3),
                   ((0, 0), (0, SEED_PAD - 3)))

    def dot(a, w):
        return jnp.dot(a.astype(jnp.bfloat16).astype(jnp.float32),
                       w.astype(jnp.float32),
                       precision=lax.Precision.HIGHEST)

    p = packed
    h = dot(feat, p["w1f"]) + dot(seed, p["w1s"]) + p["b1"]
    h = jnp.maximum(h, 0.0)
    h = jnp.maximum(dot(h, p["w2"]) + p["b2"], 0.0)
    fd1 = dot(h, p["w3"]) + p["b3"]
    g = dot(feat, p["w4f"]) + dot(fd1, p["w4s"]) + p["b4"]
    g = jnp.maximum(g, 0.0)
    g = jnp.maximum(dot(g, p["w5"]) + p["b5"], 0.0)
    fd2 = dot(g, p["w6"]) + p["b6"]
    fd2 = fd2[:, :3].reshape(bs, num_sample, 3)
    return jnp.transpose(fd2, (0, 2, 1))


if __name__ == "__main__":
    key = jax.random.PRNGKey(0)
    kx, kc, kp = jax.random.split(key, 3)

    bs = 2
    in_channel = 16
    step = 4                       # num_sample = 16 points
    hidden_dim = 64                # small test size (module default is 512)

    x = jax.random.normal(kx, (bs, in_channel), jnp.float32)
    c = jax.random.normal(kc, (bs, 3, step * step), jnp.float32)

    raw = init_subfold_params(kp, in_channel, hidden_dim)
    params = fold_and_pack_params(raw)

    out = subfold_pallas(x, c, params, tm=256)
    out = jax.block_until_ready(out)

    ref = subfold_ref(x, c, params)
    assert out.shape == (bs, 3, step * step)
    assert jnp.allclose(out, ref, atol=2e-3, rtol=2e-3), "mismatch vs reference"

    print("KERNEL_OK")
</pallas_src>

<mosaic_0001>
module attributes {stable_mosaic.version = 11 : i64} {
  func.func @_subfold_kernel(%arg0: i32, %arg1: memref<32x16xbf16, #tpu.memory_space<vmem>>, %arg2: memref<32x8xbf16, #tpu.memory_space<vmem>>, %arg3: memref<16x64xbf16, #tpu.memory_space<vmem>>, %arg4: memref<8x64xbf16, #tpu.memory_space<vmem>>, %arg5: memref<1x64xf32, #tpu.memory_space<vmem>>, %arg6: memref<64x32xbf16, #tpu.memory_space<vmem>>, %arg7: memref<1x32xf32, #tpu.memory_space<vmem>>, %arg8: memref<32x128xbf16, #tpu.memory_space<vmem>>, %arg9: memref<1x128xf32, #tpu.memory_space<vmem>>, %arg10: memref<16x64xbf16, #tpu.memory_space<vmem>>, %arg11: memref<128x64xbf16, #tpu.memory_space<vmem>>, %arg12: memref<1x64xf32, #tpu.memory_space<vmem>>, %arg13: memref<64x32xbf16, #tpu.memory_space<vmem>>, %arg14: memref<1x32xf32, #tpu.memory_space<vmem>>, %arg15: memref<32x128xbf16, #tpu.memory_space<vmem>>, %arg16: memref<1x128xf32, #tpu.memory_space<vmem>>, %arg17: memref<32x128xf32, #tpu.memory_space<vmem>>) attributes {dimension_semantics = [#tpu.dimension_semantics<parallel>], iteration_bounds = array<i64: 1>, scalar_prefetch = 0 : i64, scratch_operands = 0 : i64, tpu.core_type = #tpu.core_type<tc>, window_params = [{transform_indices = @transform_0, window_bounds = array<i64: 32, 16>}, {transform_indices = @transform_1, window_bounds = array<i64: 32, 8>}, {pipeline_mode = #tpu.pipeline_mode<synchronous>, transform_indices = @transform_2, window_bounds = array<i64: 16, 64>}, {pipeline_mode = #tpu.pipeline_mode<synchronous>, transform_indices = @transform_3, window_bounds = array<i64: 8, 64>}, {pipeline_mode = #tpu.pipeline_mode<synchronous>, transform_indices = @transform_4, window_bounds = array<i64: 1, 64>}, {pipeline_mode = #tpu.pipeline_mode<synchronous>, transform_indices = @transform_5, window_bounds = array<i64: 64, 32>}, {pipeline_mode = #tpu.pipeline_mode<synchronous>, transform_indices = @transform_6, window_bounds = array<i64: 1, 32>}, {pipeline_mode = #tpu.pipeline_mode<synchronous>, transform_indices = @transform_7, window_bounds = array<i64: 32, 128>}, {pipeline_mode = #tpu.pipeline_mode<synchronous>, transform_indices = @transform_8, window_bounds = array<i64: 1, 128>}, {pipeline_mode = #tpu.pipeline_mode<synchronous>, transform_indices = @transform_9, window_bounds = array<i64: 16, 64>}, {pipeline_mode = #tpu.pipeline_mode<synchronous>, transform_indices = @transform_10, window_bounds = array<i64: 128, 64>}, {pipeline_mode = #tpu.pipeline_mode<synchronous>, transform_indices = @transform_11, window_bounds = array<i64: 1, 64>}, {pipeline_mode = #tpu.pipeline_mode<synchronous>, transform_indices = @transform_12, window_bounds = array<i64: 64, 32>}, {pipeline_mode = #tpu.pipeline_mode<synchronous>, transform_indices = @transform_13, window_bounds = array<i64: 1, 32>}, {pipeline_mode = #tpu.pipeline_mode<synchronous>, transform_indices = @transform_14, window_bounds = array<i64: 32, 128>}, {pipeline_mode = #tpu.pipeline_mode<synchronous>, transform_indices = @transform_15, window_bounds = array<i64: 1, 128>}, {transform_indices = @transform_16, window_bounds = array<i64: 32, 128>}]} {
    %c0 = arith.constant 0 : index
    %c0_0 = arith.constant 0 : index
    %0 = vector.load %arg1[%c0, %c0_0] : memref<32x16xbf16, #tpu.memory_space<vmem>>, vector<32x16xbf16>
    %c0_1 = arith.constant 0 : index
    %c0_2 = arith.constant 0 : index
    %1 = vector.load %arg2[%c0_1, %c0_2] : memref<32x8xbf16, #tpu.memory_space<vmem>>, vector<32x8xbf16>
    %c0_3 = arith.constant 0 : index
    %c0_4 = arith.constant 0 : index
    %2 = vector.load %arg3[%c0_3, %c0_4] : memref<16x64xbf16, #tpu.memory_space<vmem>>, vector<16x64xbf16>
    %cst = arith.constant dense<0.000000e+00> : vector<32x64xf32>
    %3 = tpu.matmul %0, %2, %cst {dimension_numbers = #tpu.dot_dimension_numbers<[1], [0], [0], [1], [0, 0, 1, 1], [], []>} : vector<32x16xbf16>, vector<16x64xbf16>, vector<32x64xf32> -> vector<32x64xf32>
    %c0_5 = arith.constant 0 : index
    %c0_6 = arith.constant 0 : index
    %4 = vector.load %arg4[%c0_5, %c0_6] : memref<8x64xbf16, #tpu.memory_space<vmem>>, vector<8x64xbf16>
    %cst_7 = arith.constant dense<0.000000e+00> : vector<32x64xf32>
    %5 = tpu.matmul %1, %4, %cst_7 {dimension_numbers = #tpu.dot_dimension_numbers<[1], [0], [0], [1], [0, 0, 1, 1], [], []>} : vector<32x8xbf16>, vector<8x64xbf16>, vector<32x64xf32> -> vector<32x64xf32>
    %6 = arith.addf %3, %5 : vector<32x64xf32>
    %c0_8 = arith.constant 0 : index
    %c0_9 = arith.constant 0 : index
    %7 = vector.load %arg5[%c0_8, %c0_9] : memref<1x64xf32, #tpu.memory_space<vmem>>, vector<1x64xf32>
    %8 = vector.broadcast %7 : vector<1x64xf32> to vector<32x64xf32>
    %9 = arith.addf %6, %8 : vector<32x64xf32>
    %cst_10 = arith.constant 0.000000e+00 : f32
    %10 = vector.broadcast %cst_10 : f32 to vector<32x64xf32>
    %11 = arith.maximumf %9, %10 : vector<32x64xf32>
    %12 = arith.truncf %11 : vector<32x64xf32> to vector<32x64xbf16>
    %c0_11 = arith.constant 0 : index
    %c0_12 = arith.constant 0 : index
    %13 = vector.load %arg6[%c0_11, %c0_12] : memref<64x32xbf16, #tpu.memory_space<vmem>>, vector<64x32xbf16>
    %cst_13 = arith.constant dense<0.000000e+00> : vector<32x32xf32>
    %14 = tpu.matmul %12, %13, %cst_13 {dimension_numbers = #tpu.dot_dimension_numbers<[1], [0], [0], [1], [0, 0, 1, 1], [], []>} : vector<32x64xbf16>, vector<64x32xbf16>, vector<32x32xf32> -> vector<32x32xf32>
    %c0_14 = arith.constant 0 : index
    %c0_15 = arith.constant 0 : index
    %15 = vector.load %arg7[%c0_14, %c0_15] : memref<1x32xf32, #tpu.memory_space<vmem>>, vector<1x32xf32>
    %16 = vector.broadcast %15 : vector<1x32xf32> to vector<32x32xf32>
    %17 = arith.addf %14, %16 : vector<32x32xf32>
    %cst_16 = arith.constant 0.000000e+00 : f32
    %18 = vector.broadcast %cst_16 : f32 to vector<32x32xf32>
    %19 = arith.maximumf %17, %18 : vector<32x32xf32>
    %20 = arith.truncf %19 : vector<32x32xf32> to vector<32x32xbf16>
    %c0_17 = arith.constant 0 : index
    %c0_18 = arith.constant 0 : index
    %21 = vector.load %arg8[%c0_17, %c0_18] : memref<32x128xbf16, #tpu.memory_space<vmem>>, vector<32x128xbf16>
    %cst_19 = arith.constant dense<0.000000e+00> : vector<32x128xf32>
    %22 = tpu.matmul %20, %21, %cst_19 {dimension_numbers = #tpu.dot_dimension_numbers<[1], [0], [0], [1], [0, 0, 1, 1], [], []>} : vector<32x32xbf16>, vector<32x128xbf16>, vector<32x128xf32> -> vector<32x128xf32>
    %c0_20 = arith.constant 0 : index
    %c0_21 = arith.constant 0 : index
    %23 = vector.load %arg9[%c0_20, %c0_21] : memref<1x128xf32, #tpu.memory_space<vmem>>, vector<1x128xf32>
    %24 = vector.broadcast %23 : vector<1x128xf32> to vector<32x128xf32>
    %25 = arith.addf %22, %24 : vector<32x128xf32>
    %c0_22 = arith.constant 0 : index
    %c0_23 = arith.constant 0 : index
    %26 = vector.load %arg10[%c0_22, %c0_23] : memref<16x64xbf16, #tpu.memory_space<vmem>>, vector<16x64xbf16>
    %cst_24 = arith.constant dense<0.000000e+00> : vector<32x64xf32>
    %27 = tpu.matmul %0, %26, %cst_24 {dimension_numbers = #tpu.dot_dimension_numbers<[1], [0], [0], [1], [0, 0, 1, 1], [], []>} : vector<32x16xbf16>, vector<16x64xbf16>, vector<32x64xf32> -> vector<32x64xf32>
    %28 = arith.truncf %25 : vector<32x128xf32> to vector<32x128xbf16>
    %c0_25 = arith.constant 0 : index
    %c0_26 = arith.constant 0 : index
    %29 = vector.load %arg11[%c0_25, %c0_26] : memref<128x64xbf16, #tpu.memory_space<vmem>>, vector<128x64xbf16>
    %cst_27 = arith.constant dense<0.000000e+00> : vector<32x64xf32>
    %30 = tpu.matmul %28, %29, %cst_27 {dimension_numbers = #tpu.dot_dimension_numbers<[1], [0], [0], [1], [0, 0, 1, 1], [], []>} : vector<32x128xbf16>, vector<128x64xbf16>, vector<32x64xf32> -> vector<32x64xf32>
    %31 = arith.addf %27, %30 : vector<32x64xf32>
    %c0_28 = arith.constant 0 : index
    %c0_29 = arith.constant 0 : index
    %32 = vector.load %arg12[%c0_28, %c0_29] : memref<1x64xf32, #tpu.memory_space<vmem>>, vector<1x64xf32>
    %33 = vector.broadcast %32 : vector<1x64xf32> to vector<32x64xf32>
    %34 = arith.addf %31, %33 : vector<32x64xf32>
    %cst_30 = arith.constant 0.000000e+00 : f32
    %35 = vector.broadcast %cst_30 : f32 to vector<32x64xf32>
    %36 = arith.maximumf %34, %35 : vector<32x64xf32>
    %37 = arith.truncf %36 : vector<32x64xf32> to vector<32x64xbf16>
    %c0_31 = arith.constant 0 : index
    %c0_32 = arith.constant 0 : index
    %38 = vector.load %arg13[%c0_31, %c0_32] : memref<64x32xbf16, #tpu.memory_space<vmem>>, vector<64x32xbf16>
    %cst_33 = arith.constant dense<0.000000e+00> : vector<32x32xf32>
    %39 = tpu.matmul %37, %38, %cst_33 {dimension_numbers = #tpu.dot_dimension_numbers<[1], [0], [0], [1], [0, 0, 1, 1], [], []>} : vector<32x64xbf16>, vector<64x32xbf16>, vector<32x32xf32> -> vector<32x32xf32>
    %c0_34 = arith.constant 0 : index
    %c0_35 = arith.constant 0 : index
    %40 = vector.load %arg14[%c0_34, %c0_35] : memref<1x32xf32, #tpu.memory_space<vmem>>, vector<1x32xf32>
    %41 = vector.broadcast %40 : vector<1x32xf32> to vector<32x32xf32>
    %42 = arith.addf %39, %41 : vector<32x32xf32>
    %cst_36 = arith.constant 0.000000e+00 : f32
    %43 = vector.broadcast %cst_36 : f32 to vector<32x32xf32>
    %44 = arith.maximumf %42, %43 : vector<32x32xf32>
    %45 = arith.truncf %44 : vector<32x32xf32> to vector<32x32xbf16>
    %c0_37 = arith.constant 0 : index
    %c0_38 = arith.constant 0 : index
    %46 = vector.load %arg15[%c0_37, %c0_38] : memref<32x128xbf16, #tpu.memory_space<vmem>>, vector<32x128xbf16>
    %cst_39 = arith.constant dense<0.000000e+00> : vector<32x128xf32>
    %47 = tpu.matmul %45, %46, %cst_39 {dimension_numbers = #tpu.dot_dimension_numbers<[1], [0], [0], [1], [0, 0, 1, 1], [], []>} : vector<32x32xbf16>, vector<32x128xbf16>, vector<32x128xf32> -> vector<32x128xf32>
    %c0_40 = arith.constant 0 : index
    %c0_41 = arith.constant 0 : index
    %48 = vector.load %arg16[%c0_40, %c0_41] : memref<1x128xf32, #tpu.memory_space<vmem>>, vector<1x128xf32>
    %49 = vector.broadcast %48 : vector<1x128xf32> to vector<32x128xf32>
    %50 = arith.addf %47, %49 : vector<32x128xf32>
    %c0_42 = arith.constant 0 : index
    %c0_43 = arith.constant 0 : index
    %51 = vector.load %arg17[%c0_42, %c0_43] : memref<32x128xf32, #tpu.memory_space<vmem>>, vector<32x128xf32>
    tpu.vector_store %arg17[%c0_42, %c0_43], %50 {strides = array<i32>} : memref<32x128xf32, #tpu.memory_space<vmem>>, vector<32x128xf32>,
    return
  }
  func.func @transform_0(%arg0: i32) -> (i32, i32) {
    %c0_i32 = arith.constant 0 : i32
    %c0_i32_0 = arith.constant 0 : i32
    return %arg0, %c0_i32 : i32, i32
  }
  func.func @transform_1(%arg0: i32) -> (i32, i32) {
    %c0_i32 = arith.constant 0 : i32
    %c0_i32_0 = arith.constant 0 : i32
    return %arg0, %c0_i32 : i32, i32
  }
  func.func @transform_2(%arg0: i32) -> (i32, i32) {
    %c0_i32 = arith.constant 0 : i32
    %c0_i32_0 = arith.constant 0 : i32
    %c0_i32_1 = arith.constant 0 : i32
    return %c0_i32, %c0_i32_0 : i32, i32
  }
  func.func @transform_3(%arg0: i32) -> (i32, i32) {
    %c0_i32 = arith.constant 0 : i32
    %c0_i32_0 = arith.constant 0 : i32
    %c0_i32_1 = arith.constant 0 : i32
    return %c0_i32, %c0_i32_0 : i32, i32
  }
  func.func @transform_4(%arg0: i32) -> (i32, i32) {
    %c0_i32 = arith.constant 0 : i32
    %c0_i32_0 = arith.constant 0 : i32
    %c0_i32_1 = arith.constant 0 : i32
    return %c0_i32, %c0_i32_0 : i32, i32
  }
  func.func @transform_5(%arg0: i32) -> (i32, i32) {
    %c0_i32 = arith.constant 0 : i32
    %c0_i32_0 = arith.constant 0 : i32
    %c0_i32_1 = arith.constant 0 : i32
    return %c0_i32, %c0_i32_0 : i32, i32
  }
  func.func @transform_6(%arg0: i32) -> (i32, i32) {
    %c0_i32 = arith.constant 0 : i32
    %c0_i32_0 = arith.constant 0 : i32
    %c0_i32_1 = arith.constant 0 : i32
    return %c0_i32, %c0_i32_0 : i32, i32
  }
  func.func @transform_7(%arg0: i32) -> (i32, i32) {
    %c0_i32 = arith.constant 0 : i32
    %c0_i32_0 = arith.constant 0 : i32
    %c0_i32_1 = arith.constant 0 : i32
    return %c0_i32, %c0_i32_0 : i32, i32
  }
  func.func @transform_8(%arg0: i32) -> (i32, i32) {
    %c0_i32 = arith.constant 0 : i32
    %c0_i32_0 = arith.constant 0 : i32
    %c0_i32_1 = arith.constant 0 : i32
    return %c0_i32, %c0_i32_0 : i32, i32
  }
  func.func @transform_9(%arg0: i32) -> (i32, i32) {
    %c0_i32 = arith.constant 0 : i32
    %c0_i32_0 = arith.constant 0 : i32
    %c0_i32_1 = arith.constant 0 : i32
    return %c0_i32, %c0_i32_0 : i32, i32
  }
  func.func @transform_10(%arg0: i32) -> (i32, i32) {
    %c0_i32 = arith.constant 0 : i32
    %c0_i32_0 = arith.constant 0 : i32
    %c0_i32_1 = arith.constant 0 : i32
    return %c0_i32, %c0_i32_0 : i32, i32
  }
  func.func @transform_11(%arg0: i32) -> (i32, i32) {
    %c0_i32 = arith.constant 0 : i32
    %c0_i32_0 = arith.constant 0 : i32
    %c0_i32_1 = arith.constant 0 : i32
    return %c0_i32, %c0_i32_0 : i32, i32
  }
  func.func @transform_12(%arg0: i32) -> (i32, i32) {
    %c0_i32 = arith.constant 0 : i32
    %c0_i32_0 = arith.constant 0 : i32
    %c0_i32_1 = arith.constant 0 : i32
    return %c0_i32, %c0_i32_0 : i32, i32
  }
  func.func @transform_13(%arg0: i32) -> (i32, i32) {
    %c0_i32 = arith.constant 0 : i32
    %c0_i32_0 = arith.constant 0 : i32
    %c0_i32_1 = arith.constant 0 : i32
    return %c0_i32, %c0_i32_0 : i32, i32
  }
  func.func @transform_14(%arg0: i32) -> (i32, i32) {
    %c0_i32 = arith.constant 0 : i32
    %c0_i32_0 = arith.constant 0 : i32
    %c0_i32_1 = arith.constant 0 : i32
    return %c0_i32, %c0_i32_0 : i32, i32
  }
  func.func @transform_15(%arg0: i32) -> (i32, i32) {
    %c0_i32 = arith.constant 0 : i32
    %c0_i32_0 = arith.constant 0 : i32
    %c0_i32_1 = arith.constant 0 : i32
    return %c0_i32, %c0_i32_0 : i32, i32
  }
  func.func @transform_16(%arg0: i32) -> (i32, i32) {
    %c0_i32 = arith.constant 0 : i32
    %c0_i32_0 = arith.constant 0 : i32
    return %arg0, %c0_i32 : i32, i32
  }
}

</mosaic_0001>

<llo_original>
// kernel: subfold_pallas.1
$region0: #{subfold_pallas.1}
  #allocation0 [shape = 'u32[]', space=smem, size = 0x4, offset = 0x4, fixed_abs, tag = 'smem constant byte address 0x4 - core index']
  #allocation1 [shape = 'u32[144,128]{1,0:T(1,128)}', space=vmem, size = 0x12000, scoped, tag = 'internal scratch']
  %s0 = inlined_call_operand.vmem [shape: bf16[32,16], index: 0, kind: input, shape index: {}]
  %s1 = inlined_call_operand.vmem [shape: bf16[32,8], index: 1, kind: input, shape index: {}]
  %s2 = inlined_call_operand.vmem [shape: bf16[16,64], index: 2, kind: input, shape index: {}]
  %s3 = inlined_call_operand.vmem [shape: bf16[8,64], index: 3, kind: input, shape index: {}]
  %s4 = inlined_call_operand.vmem [shape: f32[1,64], index: 4, kind: input, shape index: {}]
  %s5 = inlined_call_operand.vmem [shape: bf16[64,32], index: 5, kind: input, shape index: {}]
  %s6 = inlined_call_operand.vmem [shape: f32[1,32], index: 6, kind: input, shape index: {}]
  %s7 = inlined_call_operand.vmem [shape: bf16[32,128], index: 7, kind: input, shape index: {}]
  %s8 = inlined_call_operand.vmem [shape: f32[1,128], index: 8, kind: input, shape index: {}]
  %s9 = inlined_call_operand.vmem [shape: bf16[16,64], index: 9, kind: input, shape index: {}]
  %s10 = inlined_call_operand.vmem [shape: bf16[128,64], index: 10, kind: input, shape index: {}]
  %s11 = inlined_call_operand.vmem [shape: f32[1,64], index: 11, kind: input, shape index: {}]
  %s12 = inlined_call_operand.vmem [shape: bf16[64,32], index: 12, kind: input, shape index: {}]
  %s13 = inlined_call_operand.vmem [shape: f32[1,32], index: 13, kind: input, shape index: {}]
  %s14 = inlined_call_operand.vmem [shape: bf16[32,128], index: 14, kind: input, shape index: {}]
  %s15 = inlined_call_operand.vmem [shape: f32[1,128], index: 15, kind: input, shape index: {}]
  %s16 = inlined_call_operand.vmem [shape: f32[32,128], index: 16, kind: output, shape index: {}]
  %s17 = sld [smem:[#allocation0]]
  $region74: #{subfold_pallas.1} parent=0
    _
  %s19 = ssub.s32 1, %s17
  %s20 = scalar_select 0, %s19, %s17
  // Predicated region
  $region2: #{subfold_pallas.1} parent=0 // pred_check
    _
  $region3: #{subfold_pallas.1} parent=0 // pred_check_branch
    %22 = sbr.rel (0) target = $region5
  $region4: #{subfold_pallas.1} parent=0 // pred_region
    _
  $region5: #{subfold_pallas.1} parent=0 // pred_fallthru
    _
  // Predicated region
  $region6: #{subfold_pallas.1} parent=0 // pred_check
    _
  $region7: #{subfold_pallas.1} parent=0 // pred_check_branch
    %24 = sbr.rel (0) target = $region9
  $region8: #{subfold_pallas.1} parent=0 // pred_region
    _
  $region9: #{subfold_pallas.1} parent=0 // pred_fallthru
    _
  // Predicated region
  $region10: #{subfold_pallas.1} parent=0 // pred_check
    _
  $region11: #{subfold_pallas.1} parent=0 // pred_check_branch
    %26 = sbr.rel (0) target = $region13
  $region12: #{subfold_pallas.1} parent=0 // pred_region
    _
  $region13: #{subfold_pallas.1} parent=0 // pred_fallthru
    _
  // Predicated region
  $region14: #{subfold_pallas.1} parent=0 // pred_check
    _
  $region15: #{subfold_pallas.1} parent=0 // pred_check_branch
    %28 = sbr.rel (0) target = $region17
  $region16: #{subfold_pallas.1} parent=0 // pred_region
    _
  $region17: #{subfold_pallas.1} parent=0 // pred_fallthru
    _
  // Predicated region
  $region18: #{subfold_pallas.1} parent=0 // pred_check
    _
  $region19: #{subfold_pallas.1} parent=0 // pred_check_branch
    %30 = sbr.rel (0) target = $region21
  $region20: #{subfold_pallas.1} parent=0 // pred_region
    _
  $region21: #{subfold_pallas.1} parent=0 // pred_fallthru
    _
  // Predicated region
  $region22: #{subfold_pallas.1} parent=0 // pred_check
    _
  $region23: #{subfold_pallas.1} parent=0 // pred_check_branch
    %32 = sbr.rel (0) target = $region25
  $region24: #{subfold_pallas.1} parent=0 // pred_region
    _
  $region25: #{subfold_pallas.1} parent=0 // pred_fallthru
    _
  // Predicated region
  $region26: #{subfold_pallas.1} parent=0 // pred_check
    _
  $region27: #{subfold_pallas.1} parent=0 // pred_check_branch
    %34 = sbr.rel (0) target = $region29
  $region28: #{subfold_pallas.1} parent=0 // pred_region
    _
  $region29: #{subfold_pallas.1} parent=0 // pred_fallthru
    _
  // Predicated region
  $region30: #{subfold_pallas.1} parent=0 // pred_check
    _
  $region31: #{subfold_pallas.1} parent=0 // pred_check_branch
    %36 = sbr.rel (0) target = $region33
  $region32: #{subfold_pallas.1} parent=0 // pred_region
    _
  $region33: #{subfold_pallas.1} parent=0 // pred_fallthru
    _
  // Predicated region
  $region34: #{subfold_pallas.1} parent=0 // pred_check
    _
  $region35: #{subfold_pallas.1} parent=0 // pred_check_branch
    %38 = sbr.rel (0) target = $region37
  $region36: #{subfold_pallas.1} parent=0 // pred_region
    _
  $region37: #{subfold_pallas.1} parent=0 // pred_fallthru
    _
  // Predicated region
  $region38: #{subfold_pallas.1} parent=0 // pred_check
    _
  $region39: #{subfold_pallas.1} parent=0 // pred_check_branch
    %40 = sbr.rel (0) target = $region41
  $region40: #{subfold_pallas.1} parent=0 // pred_region
    _
  $region41: #{subfold_pallas.1} parent=0 // pred_fallthru
    _
  // Predicated region
  $region42: #{subfold_pallas.1} parent=0 // pred_check
    _
  $region43: #{subfold_pallas.1} parent=0 // pred_check_branch
    %42 = sbr.rel (0) target = $region45
  $region44: #{subfold_pallas.1} parent=0 // pred_region
    _
  $region45: #{subfold_pallas.1} parent=0 // pred_fallthru
    _
  // Predicated region
  $region46: #{subfold_pallas.1} parent=0 // pred_check
    _
  $region47: #{subfold_pallas.1} parent=0 // pred_check_branch
    %44 = sbr.rel (0) target = $region49
  $region48: #{subfold_pallas.1} parent=0 // pred_region
    _
  $region49: #{subfold_pallas.1} parent=0 // pred_fallthru
    _
  // Predicated region
  $region50: #{subfold_pallas.1} parent=0 // pred_check
    _
  $region51: #{subfold_pallas.1} parent=0 // pred_check_branch
    %46 = sbr.rel (0) target = $region53
  $region52: #{subfold_pallas.1} parent=0 // pred_region
    _
  $region53: #{subfold_pallas.1} parent=0 // pred_fallthru
    _
  // Predicated region
  $region54: #{subfold_pallas.1} parent=0 // pred_check
    _
  $region55: #{subfold_pallas.1} parent=0 // pred_check_branch
    %48 = sbr.rel (0) target = $region57
  $region56: #{subfold_pallas.1} parent=0 // pred_region
    _
  $region57: #{subfold_pallas.1} parent=0 // pred_fallthru
    _
  // Predicated region
  $region58: #{subfold_pallas.1} parent=0 // pred_check
    _
  $region59: #{subfold_pallas.1} parent=0 // pred_check_branch
    %50 = sbr.rel (0) target = $region61
  $region60: #{subfold_pallas.1} parent=0 // pred_region
    _
  $region61: #{subfold_pallas.1} parent=0 // pred_fallthru
    _
  // Predicated region
  $region62: #{subfold_pallas.1} parent=0 // pred_check
    _
  $region63: #{subfold_pallas.1} parent=0 // pred_check_branch
    %52 = sbr.rel (0) target = $region65
  $region64: #{subfold_pallas.1} parent=0 // pred_region
    _
  $region65: #{subfold_pallas.1} parent=0 // pred_fallthru
    _
  %v54 = vld [vmem:[%s0] sm:$0xf]
  %v55 = vld [vmem:[%s0 + $0x4] sm:$0xf]
  %v56 = vld [vmem:[%s0 + $0x8] sm:$0xf]
  %v57 = vld [vmem:[%s0 + $0xc] sm:$0xf]
  %v58 = vld [vmem:[%s1] sm:$0xf]
  %v59 = vld [vmem:[%s1 + $0x4] sm:$0xf]
  %v60 = vld [vmem:[%s1 + $0x8] sm:$0xf]
  %v61 = vld [vmem:[%s1 + $0xc] sm:$0xf]
  %v62 = vld [vmem:[%s2] sm:$0xf]
  %v63 = vld [vmem:[%s2 + $0x4] sm:$0xf]
  %v64 = vld [vmem:[%s3] sm:$0xf]
  %v69 = vunpack.c.l.b16 %v58
  %v70 = vunpack.c.l.b16 %v59
  %v71 = vunpack.c.l.b16 %v60
  %v72 = vunpack.c.l.b16 %v61
  %v73 = vpack.c.b16 %v70, %v69
  %v74 = vpack.c.b16 %v72, %v71
  %vm75 = vcmask 64512
  %v77 = vsel %vm75, %v73, 0
  %v80 = vsel %vm75, %v74, 0
  %vm82 = vcmask 1043456
  %v84 = vsel %vm82, %v64, 0
  %86 = vmatprep.subr.bf16.mxu0 0
  %87 = vmatpush1.bf16.msra.mxu0 %v84
  %88 = vmatprep.subr.bf16.mxu0 0
  %89 = vmatpush1.bf16.msra.mxu0 0
  %90 = vmatprep.subr.bf16.mxu0 0
  %91 = vmatpush1.bf16.msra.mxu0 0
  %92 = vmatprep.subr.bf16.mxu0 0
  %93 = vmatpush1.bf16.msra.mxu0 0
  %94 = vmatprep.subr.bf16.mxu0 0
  %95 = vmatpush1.bf16.msra.mxu0 0
  %96 = vmatprep.subr.bf16.mxu0 0
  %97 = vmatpush1.bf16.msra.mxu0 0
  %98 = vmatprep.subr.bf16.mxu0 0
  %99 = vmatpush1.bf16.msra.mxu0 0
  %100 = vmatprep.subr.bf16.mxu0 0
  %101 = vmatpush1.bf16.msra.mxu0 0
  %102 = vmatprep.subr.bf16.mxu0 0
  %103 = vmatpush1.bf16.msra.mxu0 0
  %104 = vmatprep.subr.bf16.mxu0 0
  %105 = vmatpush1.bf16.msra.mxu0 0
  %106 = vmatprep.subr.bf16.mxu0 0
  %107 = vmatpush1.bf16.msra.mxu0 0
  %108 = vmatprep.subr.bf16.mxu0 0
  %109 = vmatpush1.bf16.msra.mxu0 0
  %110 = vmatprep.subr.bf16.mxu0 0
  %111 = vmatpush1.bf16.msra.mxu0 0
  %112 = vmatprep.subr.bf16.mxu0 0
  %113 = vmatpush1.bf16.msra.mxu0 0
  %114 = vmatprep.subr.bf16.mxu0 0
  %115 = vmatpush1.bf16.msra.mxu0 0
  %116 = vmatprep.subr.bf16.mxu0 0
  %117 = vmatpush1.bf16.msra.mxu0 0
  %118 = vmatprep.mubr.bf16.mxu0 0
  %119 = vmatmul.mubr.bf16.gmra.mrb[0].mxu0 %v77
  %v120 = vpop.f32.mrb[0].mxu0
  %v121 = vadd.f32 0.0, %v120
  %v122 = vpop.f32.mrb[0].mxu0
  %v123 = vpop.f32.mrb[0].mxu0
  %v124 = vadd.f32 0.0, %v123
  %v125 = vpop.f32.mrb[0].mxu0
  %126 = vmatprep.mubr.bf16.mxu0 0
  %127 = vmatmul.mubr.bf16.gmra.mrb[0].mxu0 %v80
  %v128 = vpop.f32.mrb[0].mxu0
  %v129 = vadd.f32 0.0, %v128
  %v130 = vpop.f32.mrb[0].mxu0
  %v131 = vpop.f32.mrb[0].mxu0
  %v132 = vadd.f32 0.0, %v131
  %v133 = vpop.f32.mrb[0].mxu0
  %134 = vdwg.mxu0
  %v139 = vunpack.c.l.b16 %v54
  %v140 = vunpack.c.l.b16 %v55
  %v141 = vunpack.c.l.b16 %v56
  %v142 = vunpack.c.l.b16 %v57
  %v143 = vpack.c.b16 %v140, %v139
  %v144 = vpack.c.b16 %v142, %v141
  %v147 = vunpack.c.l.b16 %v62
  %v148 = vunpack.c.l.b16 %v63
  %v149 = vpack.c.b16 %v148, %v147
  %vm151 = vcmask 130048
  %v153 = vsel %vm151, %v143, 0
  %v156 = vsel %vm151, %v144, 0
  %158 = vmatprep.subr.bf16.mxu0 0
  %159 = vmatpush1.bf16.msra.mxu0 %v149
  %160 = vmatprep.subr.bf16.mxu0 0
  %161 = vmatpush1.bf16.msra.mxu0 0
  %162 = vmatprep.subr.bf16.mxu0 0
  %163 = vmatpush1.bf16.msra.mxu0 0
  %164 = vmatprep.subr.bf16.mxu0 0
  %165 = vmatpush1.bf16.msra.mxu0 0
  %166 = vmatprep.subr.bf16.mxu0 0
  %167 = vmatpush1.bf16.msra.mxu0 0
  %168 = vmatprep.subr.bf16.mxu0 0
  %169 = vmatpush1.bf16.msra.mxu0 0
  %170 = vmatprep.subr.bf16.mxu0 0
  %171 = vmatpush1.bf16.msra.mxu0 0
  %172 = vmatprep.subr.bf16.mxu0 0
  %173 = vmatpush1.bf16.msra.mxu0 0
  %174 = vmatprep.subr.bf16.mxu0 0
  %175 = vmatpush1.bf16.msra.mxu0 0
  %176 = vmatprep.subr.bf16.mxu0 0
  %177 = vmatpush1.bf16.msra.mxu0 0
  %178 = vmatprep.subr.bf16.mxu0 0
  %179 = vmatpush1.bf16.msra.mxu0 0
  %180 = vmatprep.subr.bf16.mxu0 0
  %181 = vmatpush1.bf16.msra.mxu0 0
  %182 = vmatprep.subr.bf16.mxu0 0
  %183 = vmatpush1.bf16.msra.mxu0 0
  %184 = vmatprep.subr.bf16.mxu0 0
  %185 = vmatpush1.bf16.msra.mxu0 0
  %186 = vmatprep.subr.bf16.mxu0 0
  %187 = vmatpush1.bf16.msra.mxu0 0
  %188 = vmatprep.subr.bf16.mxu0 0
  %189 = vmatpush1.bf16.msra.mxu0 0
  %190 = vmatprep.mubr.bf16.mxu0 0
  %191 = vmatmul.mubr.bf16.gmra.mrb[0].mxu0 %v153
  %v192 = vpop.f32.mrb[0].mxu0
  %v193 = vadd.f32 %v121, %v192
  %v194 = vpop.f32.mrb[0].mxu0
  %v195 = vpop.f32.mrb[0].mxu0
  %v196 = vadd.f32 %v124, %v195
  %v197 = vpop.f32.mrb[0].mxu0
  %198 = vmatprep.mubr.bf16.mxu0 0
  %199 = vmatmul.mubr.bf16.gmra.mrb[0].mxu0 %v156
  %v200 = vpop.f32.mrb[0].mxu0
  %v201 = vadd.f32 %v129, %v200
  %v202 = vpop.f32.mrb[0].mxu0
  %v203 = vpop.f32.mrb[0].mxu0
  %v204 = vadd.f32 %v132, %v203
  %v205 = vpop.f32.mrb[0].mxu0
  %206 = vdwg.mxu0
  %v207 = vld [vmem:[%s4] sm:$0x1]
  %v209 = vlaneseq
  %v210 = vshrl.u32 %v209, 7
  %v211 = vsub.s32 0, %v210
  %v212 = vrot.slane %v207, %v211
  %v214 = vadd.f32 %v193, %v212
  %v215 = vadd.f32 %v196, %v212
  %v216 = vadd.f32 %v201, %v212
  %v217 = vadd.f32 %v204, %v212
  %v218 = vmax.f32 %v214, 0.0
  %v219 = vmax.f32 %v215, 0.0
  %v220 = vmax.f32 %v216, 0.0
  %v221 = vmax.f32 %v217, 0.0
  %v222 = vpack.c.bf16 %v219, %v218
  %v223 = vpack.c.bf16 %v221, %v220
  %v224 = vld [vmem:[%s5] sm:$0xf]
  %v225 = vld [vmem:[%s5 + $0x4] sm:$0xf]
  %v226 = vld [vmem:[%s5 + $0x8] sm:$0xf]
  %v227 = vld [vmem:[%s5 + $0xc] sm:$0xf]
  %v228 = vld [vmem:[%s5 + $0x10] sm:$0xf]
  %v229 = vld [vmem:[%s5 + $0x14] sm:$0xf]
  %v230 = vld [vmem:[%s5 + $0x18] sm:$0xf]
  %v231 = vld [vmem:[%s5 + $0x1c] sm:$0xf]
  %v232 = vld [vmem:[%s6] sm:$0x1]
  %v234 = vlaneseq
  %v235 = vshrl.u32 %v234, 7
  %v236 = vsub.s32 0, %v235
  %v237 = vrot.slane %v232, %v236
  %v247 = vunpack.c.l.b16 %v224
  %v248 = vunpack.c.l.b16 %v225
  %v249 = vunpack.c.l.b16 %v226
  %v250 = vunpack.c.l.b16 %v227
  %v251 = vunpack.c.l.b16 %v228
  %v252 = vunpack.c.l.b16 %v229
  %v253 = vunpack.c.l.b16 %v230
  %v254 = vunpack.c.l.b16 %v231
  %v255 = vpack.c.b16 %v248, %v247
  %v256 = vpack.c.b16 %v250, %v249
  %v257 = vpack.c.b16 %v252, %v251
  %v258 = vpack.c.b16 %v254, %v253
  %vm263 = vcmask 523264
  %v265 = vsel %vm263, %v222, 0
  %v268 = vsel %vm263, %v223, 0
  %270 = vmatprep.subr.bf16.mxu0 0
  %271 = vmatpush1.bf16.msra.mxu0 %v255
  %272 = vmatprep.subr.bf16.mxu0 0
  %273 = vmatpush1.bf16.msra.mxu0 %v256
  %274 = vmatprep.subr.bf16.mxu0 0
  %275 = vmatpush1.bf16.msra.mxu0 %v257
  %276 = vmatprep.subr.bf16.mxu0 0
  %277 = vmatpush1.bf16.msra.mxu0 %v258
  %278 = vmatprep.subr.bf16.mxu0 0
  %279 = vmatpush1.bf16.msra.mxu0 0
  %280 = vmatprep.subr.bf16.mxu0 0
  %281 = vmatpush1.bf16.msra.mxu0 0
  %282 = vmatprep.subr.bf16.mxu0 0
  %283 = vmatpush1.bf16.msra.mxu0 0
  %284 = vmatprep.subr.bf16.mxu0 0
  %285 = vmatpush1.bf16.msra.mxu0 0
  %286 = vmatprep.subr.bf16.mxu0 0
  %287 = vmatpush1.bf16.msra.mxu0 0
  %288 = vmatprep.subr.bf16.mxu0 0
  %289 = vmatpush1.bf16.msra.mxu0 0
  %290 = vmatprep.subr.bf16.mxu0 0
  %291 = vmatpush1.bf16.msra.mxu0 0
  %292 = vmatprep.subr.bf16.mxu0 0
  %293 = vmatpush1.bf16.msra.mxu0 0
  %294 = vmatprep.subr.bf16.mxu0 0
  %295 = vmatpush1.bf16.msra.mxu0 0
  %296 = vmatprep.subr.bf16.mxu0 0
  %297 = vmatpush1.bf16.msra.mxu0 0
  %298 = vmatprep.subr.bf16.mxu0 0
  %299 = vmatpush1.bf16.msra.mxu0 0
  %300 = vmatprep.subr.bf16.mxu0 0
  %301 = vmatpush1.bf16.msra.mxu0 0
  %302 = vmatprep.mubr.bf16.mxu0 0
  %303 = vmatmul.mubr.bf16.gmra.mrb[0].mxu0 %v265
  %v304 = vpop.f32.mrb[0].mxu0
  %v305 = vadd.f32 %v237, %v304
  %v306 = vpop.f32.mrb[0].mxu0
  %v307 = vpop.f32.mrb[0].mxu0
  %v308 = vadd.f32 %v237, %v307
  %v309 = vpop.f32.mrb[0].mxu0
  %310 = vmatprep.mubr.bf16.mxu0 0
  %311 = vmatmul.mubr.bf16.gmra.mrb[0].mxu0 %v268
  %v312 = vpop.f32.mrb[0].mxu0
  %v313 = vadd.f32 %v237, %v312
  %v314 = vpop.f32.mrb[0].mxu0
  %v315 = vpop.f32.mrb[0].mxu0
  %v316 = vadd.f32 %v237, %v315
  %v317 = vpop.f32.mrb[0].mxu0
  %318 = vdwg.mxu0
  %v319 = vmax.f32 %v305, 0.0
  %v320 = vmax.f32 %v308, 0.0
  %v321 = vmax.f32 %v313, 0.0
  %v322 = vmax.f32 %v316, 0.0
  %v323 = vpack.c.bf16 %v320, %v319
  %v324 = vpack.c.bf16 %v322, %v321
  %v325 = vld [vmem:[%s7] sm:$0xf]
  %v326 = vld [vmem:[%s7 + $0x4] sm:$0xf]
  %v327 = vld [vmem:[%s7 + $0x8] sm:$0xf]
  %v328 = vld [vmem:[%s7 + $0xc] sm:$0xf]
  %v329 = vld [vmem:[%s8] sm:$0x1]
  %v331 = vlaneseq
  %v332 = vshrl.u32 %v331, 7
  %v333 = vsub.s32 0, %v332
  %v334 = vrot.slane %v329, %v333
  %v340 = vunpack.c.l.b16 %v325
  %v341 = vunpack.c.l.b16 %v326
  %v342 = vunpack.c.l.b16 %v327
  %v343 = vunpack.c.l.b16 %v328
  %v344 = vpack.c.b16 %v341, %v340
  %v345 = vpack.c.b16 %v343, %v342
  %vm348 = vcmask 261120
  %v350 = vsel %vm348, %v323, 0
  %v353 = vsel %vm348, %v324, 0
  %355 = vmatprep.subr.bf16.mxu0 0
  %356 = vmatpush1.bf16.msra.mxu0 %v344
  %357 = vmatprep.subr.bf16.mxu0 0
  %358 = vmatpush1.bf16.msra.mxu0 %v345
  %359 = vmatprep.subr.bf16.mxu0 0
  %360 = vmatpush1.bf16.msra.mxu0 0
  %361 = vmatprep.subr.bf16.mxu0 0
  %362 = vmatpush1.bf16.msra.mxu0 0
  %363 = vmatprep.subr.bf16.mxu0 0
  %364 = vmatpush1.bf16.msra.mxu0 0
  %365 = vmatprep.subr.bf16.mxu0 0
  %366 = vmatpush1.bf16.msra.mxu0 0
  %367 = vmatprep.subr.bf16.mxu0 0
  %368 = vmatpush1.bf16.msra.mxu0 0
  %369 = vmatprep.subr.bf16.mxu0 0
  %370 = vmatpush1.bf16.msra.mxu0 0
  %371 = vmatprep.subr.bf16.mxu0 0
  %372 = vmatpush1.bf16.msra.mxu0 0
  %373 = vmatprep.subr.bf16.mxu0 0
  %374 = vmatpush1.bf16.msra.mxu0 0
  %375 = vmatprep.subr.bf16.mxu0 0
  %376 = vmatpush1.bf16.msra.mxu0 0
  %377 = vmatprep.subr.bf16.mxu0 0
  %378 = vmatpush1.bf16.msra.mxu0 0
  %379 = vmatprep.subr.bf16.mxu0 0
  %380 = vmatpush1.bf16.msra.mxu0 0
  %381 = vmatprep.subr.bf16.mxu0 0
  %382 = vmatpush1.bf16.msra.mxu0 0
  %383 = vmatprep.subr.bf16.mxu0 0
  %384 = vmatpush1.bf16.msra.mxu0 0
  %385 = vmatprep.subr.bf16.mxu0 0
  %386 = vmatpush1.bf16.msra.mxu0 0
  %387 = vmatprep.mubr.bf16.mxu0 0
  %388 = vmatmul.mubr.bf16.gmra.mrb[0].mxu0 %v350
  %v389 = vpop.f32.mrb[0].mxu0
  %v390 = vadd.f32 %v334, %v389
  %v391 = vpop.f32.mrb[0].mxu0
  %v392 = vpop.f32.mrb[0].mxu0
  %v393 = vadd.f32 %v334, %v392
  %v394 = vpop.f32.mrb[0].mxu0
  %395 = vmatprep.mubr.bf16.mxu0 0
  %396 = vmatmul.mubr.bf16.gmra.mrb[0].mxu0 %v353
  %v397 = vpop.f32.mrb[0].mxu0
  %v398 = vadd.f32 %v334, %v397
  %v399 = vpop.f32.mrb[0].mxu0
  %v400 = vpop.f32.mrb[0].mxu0
  %v401 = vadd.f32 %v334, %v400
  %v402 = vpop.f32.mrb[0].mxu0
  %403 = vdwg.mxu0
  %v404 = vld [vmem:[%s9] sm:$0xf]
  %v405 = vld [vmem:[%s9 + $0x4] sm:$0xf]
  %v406 = vpack.c.bf16 %v393, %v390
  %v407 = vpack.c.bf16 %v401, %v398
  %v408 = vld [vmem:[%s10] sm:$0xf]
  %v409 = vld [vmem:[%s10 + $0x4] sm:$0xf]
  %v410 = vld [vmem:[%s10 + $0x8] sm:$0xf]
  %v411 = vld [vmem:[%s10 + $0xc] sm:$0xf]
  %v412 = vld [vmem:[%s10 + $0x10] sm:$0xf]
  %v413 = vld [vmem:[%s10 + $0x14] sm:$0xf]
  %v414 = vld [vmem:[%s10 + $0x18] sm:$0xf]
  %v415 = vld [vmem:[%s10 + $0x1c] sm:$0xf]
  %v416 = vld [vmem:[%s10 + $0x20] sm:$0xf]
  %v417 = vld [vmem:[%s10 + $0x24] sm:$0xf]
  %v418 = vld [vmem:[%s10 + $0x28] sm:$0xf]
  %v419 = vld [vmem:[%s10 + $0x2c] sm:$0xf]
  %v420 = vld [vmem:[%s10 + $0x30] sm:$0xf]
  %v421 = vld [vmem:[%s10 + $0x34] sm:$0xf]
  %v422 = vld [vmem:[%s10 + $0x38] sm:$0xf]
  %v423 = vld [vmem:[%s10 + $0x3c] sm:$0xf]
  %v440 = vunpack.c.l.b16 %v408
  %v441 = vunpack.c.l.b16 %v409
  %v442 = vunpack.c.l.b16 %v410
  %v443 = vunpack.c.l.b16 %v411
  %v444 = vunpack.c.l.b16 %v412
  %v445 = vunpack.c.l.b16 %v413
  %v446 = vunpack.c.l.b16 %v414
  %v447 = vunpack.c.l.b16 %v415
  %v448 = vunpack.c.l.b16 %v416
  %v449 = vunpack.c.l.b16 %v417
  %v450 = vunpack.c.l.b16 %v418
  %v451 = vunpack.c.l.b16 %v419
  %v452 = vunpack.c.l.b16 %v420
  %v453 = vunpack.c.l.b16 %v421
  %v454 = vunpack.c.l.b16 %v422
  %v455 = vunpack.c.l.b16 %v423
  %v456 = vpack.c.b16 %v441, %v440
  %v457 = vpack.c.b16 %v443, %v442
  %v458 = vpack.c.b16 %v445, %v444
  %v459 = vpack.c.b16 %v447, %v446
  %v460 = vpack.c.b16 %v449, %v448
  %v461 = vpack.c.b16 %v451, %v450
  %v462 = vpack.c.b16 %v453, %v452
  %v463 = vpack.c.b16 %v455, %v454
  %472 = vmatprep.subr.bf16.mxu0 0
  %473 = vmatpush1.bf16.msra.mxu0 %v456
  %474 = vmatprep.subr.bf16.mxu0 0
  %475 = vmatpush1.bf16.msra.mxu0 %v457
  %476 = vmatprep.subr.bf16.mxu0 0
  %477 = vmatpush1.bf16.msra.mxu0 %v458
  %478 = vmatprep.subr.bf16.mxu0 0
  %479 = vmatpush1.bf16.msra.mxu0 %v459
  %480 = vmatprep.subr.bf16.mxu0 0
  %481 = vmatpush1.bf16.msra.mxu0 %v460
  %482 = vmatprep.subr.bf16.mxu0 0
  %483 = vmatpush1.bf16.msra.mxu0 %v461
  %484 = vmatprep.subr.bf16.mxu0 0
  %485 = vmatpush1.bf16.msra.mxu0 %v462
  %486 = vmatprep.subr.bf16.mxu0 0
  %487 = vmatpush1.bf16.msra.mxu0 %v463
  %488 = vmatprep.subr.bf16.mxu0 0
  %489 = vmatpush1.bf16.msra.mxu0 0
  %490 = vmatprep.subr.bf16.mxu0 0
  %491 = vmatpush1.bf16.msra.mxu0 0
  %492 = vmatprep.subr.bf16.mxu0 0
  %493 = vmatpush1.bf16.msra.mxu0 0
  %494 = vmatprep.subr.bf16.mxu0 0
  %495 = vmatpush1.bf16.msra.mxu0 0
  %496 = vmatprep.subr.bf16.mxu0 0
  %497 = vmatpush1.bf16.msra.mxu0 0
  %498 = vmatprep.subr.bf16.mxu0 0
  %499 = vmatpush1.bf16.msra.mxu0 0
  %500 = vmatprep.subr.bf16.mxu0 0
  %501 = vmatpush1.bf16.msra.mxu0 0
  %502 = vmatprep.subr.bf16.mxu0 0
  %503 = vmatpush1.bf16.msra.mxu0 0
  %504 = vmatprep.mubr.bf16.mxu0 0
  %505 = vmatmul.mubr.bf16.gmra.mrb[0].mxu0 %v406
  %v506 = vpop.f32.mrb[0].mxu0
  %v507 = vadd.f32 0.0, %v506
  %v508 = vpop.f32.mrb[0].mxu0
  %v509 = vpop.f32.mrb[0].mxu0
  %v510 = vadd.f32 0.0, %v509
  %v511 = vpop.f32.mrb[0].mxu0
  %512 = vmatprep.mubr.bf16.mxu0 0
  %513 = vmatmul.mubr.bf16.gmra.mrb[0].mxu0 %v407
  %v514 = vpop.f32.mrb[0].mxu0
  %v515 = vadd.f32 0.0, %v514
  %v516 = vpop.f32.mrb[0].mxu0
  %v517 = vpop.f32.mrb[0].mxu0
  %v518 = vadd.f32 0.0, %v517
  %v519 = vpop.f32.mrb[0].mxu0
  %520 = vdwg.mxu0
  %v523 = vunpack.c.l.b16 %v404
  %v524 = vunpack.c.l.b16 %v405
  %v525 = vpack.c.b16 %v524, %v523
  %527 = vmatprep.subr.bf16.mxu0 0
  %528 = vmatpush1.bf16.msra.mxu0 %v525
  %529 = vmatprep.subr.bf16.mxu0 0
  %530 = vmatpush1.bf16.msra.mxu0 0
  %531 = vmatprep.subr.bf16.mxu0 0
  %532 = vmatpush1.bf16.msra.mxu0 0
  %533 = vmatprep.subr.bf16.mxu0 0
  %534 = vmatpush1.bf16.msra.mxu0 0
  %535 = vmatprep.subr.bf16.mxu0 0
  %536 = vmatpush1.bf16.msra.mxu0 0
  %537 = vmatprep.subr.bf16.mxu0 0
  %538 = vmatpush1.bf16.msra.mxu0 0
  %539 = vmatprep.subr.bf16.mxu0 0
  %540 = vmatpush1.bf16.msra.mxu0 0
  %541 = vmatprep.subr.bf16.mxu0 0
  %542 = vmatpush1.bf16.msra.mxu0 0
  %543 = vmatprep.subr.bf16.mxu0 0
  %544 = vmatpush1.bf16.msra.mxu0 0
  %545 = vmatprep.subr.bf16.mxu0 0
  %546 = vmatpush1.bf16.msra.mxu0 0
  %547 = vmatprep.subr.bf16.mxu0 0
  %548 = vmatpush1.bf16.msra.mxu0 0
  %549 = vmatprep.subr.bf16.mxu0 0
  %550 = vmatpush1.bf16.msra.mxu0 0
  %551 = vmatprep.subr.bf16.mxu0 0
  %552 = vmatpush1.bf16.msra.mxu0 0
  %553 = vmatprep.subr.bf16.mxu0 0
  %554 = vmatpush1.bf16.msra.mxu0 0
  %555 = vmatprep.subr.bf16.mxu0 0
  %556 = vmatpush1.bf16.msra.mxu0 0
  %557 = vmatprep.subr.bf16.mxu0 0
  %558 = vmatpush1.bf16.msra.mxu0 0
  %559 = vmatprep.mubr.bf16.mxu0 0
  %560 = vmatmul.mubr.bf16.gmra.mrb[0].mxu0 %v153
  %v561 = vpop.f32.mrb[0].mxu0
  %v562 = vadd.f32 %v507, %v561
  %v563 = vpop.f32.mrb[0].mxu0
  %v564 = vpop.f32.mrb[0].mxu0
  %v565 = vadd.f32 %v510, %v564
  %v566 = vpop.f32.mrb[0].mxu0
  %567 = vmatprep.mubr.bf16.mxu0 0
  %568 = vmatmul.mubr.bf16.gmra.mrb[0].mxu0 %v156
  %v569 = vpop.f32.mrb[0].mxu0
  %v570 = vadd.f32 %v515, %v569
  %v571 = vpop.f32.mrb[0].mxu0
  %v572 = vpop.f32.mrb[0].mxu0
  %v573 = vadd.f32 %v518, %v572
  %v574 = vpop.f32.mrb[0].mxu0
  %575 = vdwg.mxu0
  %v576 = vld [vmem:[%s11] sm:$0x1]
  %v578 = vlaneseq
  %v579 = vshrl.u32 %v578, 7
  %v580 = vsub.s32 0, %v579
  %v581 = vrot.slane %v576, %v580
  %v583 = vadd.f32 %v562, %v581
  %v584 = vadd.f32 %v565, %v581
  %v585 = vadd.f32 %v570, %v581
  %v586 = vadd.f32 %v573, %v581
  %v587 = vmax.f32 %v583, 0.0
  %v588 = vmax.f32 %v584, 0.0
  %v589 = vmax.f32 %v585, 0.0
  %v590 = vmax.f32 %v586, 0.0
  %v591 = vpack.c.bf16 %v588, %v587
  %v592 = vpack.c.bf16 %v590, %v589
  %v593 = vld [vmem:[%s12] sm:$0xf]
  %v594 = vld [vmem:[%s12 + $0x4] sm:$0xf]
  %v595 = vld [vmem:[%s12 + $0x8] sm:$0xf]
  %v596 = vld [vmem:[%s12 + $0xc] sm:$0xf]
  %v597 = vld [vmem:[%s12 + $0x10] sm:$0xf]
  %v598 = vld [vmem:[%s12 + $0x14] sm:$0xf]
  %v599 = vld [vmem:[%s12 + $0x18] sm:$0xf]
  %v600 = vld [vmem:[%s12 + $0x1c] sm:$0xf]
  %v601 = vld [vmem:[%s13] sm:$0x1]
  %v603 = vlaneseq
  %v604 = vshrl.u32 %v603, 7
  %v605 = vsub.s32 0, %v604
  %v606 = vrot.slane %v601, %v605
  %v616 = vunpack.c.l.b16 %v593
  %v617 = vunpack.c.l.b16 %v594
  %v618 = vunpack.c.l.b16 %v595
  %v619 = vunpack.c.l.b16 %v596
  %v620 = vunpack.c.l.b16 %v597
  %v621 = vunpack.c.l.b16 %v598
  %v622 = vunpack.c.l.b16 %v599
  %v623 = vunpack.c.l.b16 %v600
  %v624 = vpack.c.b16 %v617, %v616
  %v625 = vpack.c.b16 %v619, %v618
  %v626 = vpack.c.b16 %v621, %v620
  %v627 = vpack.c.b16 %v623, %v622
  %v633 = vsel %vm263, %v591, 0
  %v636 = vsel %vm263, %v592, 0
  %638 = vmatprep.subr.bf16.mxu0 0
  %639 = vmatpush1.bf16.msra.mxu0 %v624
  %640 = vmatprep.subr.bf16.mxu0 0
  %641 = vmatpush1.bf16.msra.mxu0 %v625
  %642 = vmatprep.subr.bf16.mxu0 0
  %643 = vmatpush1.bf16.msra.mxu0 %v626
  %644 = vmatprep.subr.bf16.mxu0 0
  %645 = vmatpush1.bf16.msra.mxu0 %v627
  %646 = vmatprep.subr.bf16.mxu0 0
  %647 = vmatpush1.bf16.msra.mxu0 0
  %648 = vmatprep.subr.bf16.mxu0 0
  %649 = vmatpush1.bf16.msra.mxu0 0
  %650 = vmatprep.subr.bf16.mxu0 0
  %651 = vmatpush1.bf16.msra.mxu0 0
  %652 = vmatprep.subr.bf16.mxu0 0
  %653 = vmatpush1.bf16.msra.mxu0 0
  %654 = vmatprep.subr.bf16.mxu0 0
  %655 = vmatpush1.bf16.msra.mxu0 0
  %656 = vmatprep.subr.bf16.mxu0 0
  %657 = vmatpush1.bf16.msra.mxu0 0
  %658 = vmatprep.subr.bf16.mxu0 0
  %659 = vmatpush1.bf16.msra.mxu0 0
  %660 = vmatprep.subr.bf16.mxu0 0
  %661 = vmatpush1.bf16.msra.mxu0 0
  %662 = vmatprep.subr.bf16.mxu0 0
  %663 = vmatpush1.bf16.msra.mxu0 0
  %664 = vmatprep.subr.bf16.mxu0 0
  %665 = vmatpush1.bf16.msra.mxu0 0
  %666 = vmatprep.subr.bf16.mxu0 0
  %667 = vmatpush1.bf16.msra.mxu0 0
  %668 = vmatprep.subr.bf16.mxu0 0
  %669 = vmatpush1.bf16.msra.mxu0 0
  %670 = vmatprep.mubr.bf16.mxu0 0
  %671 = vmatmul.mubr.bf16.gmra.mrb[0].mxu0 %v633
  %v672 = vpop.f32.mrb[0].mxu0
  %v673 = vadd.f32 %v606, %v672
  %v674 = vpop.f32.mrb[0].mxu0
  %v675 = vpop.f32.mrb[0].mxu0
  %v676 = vadd.f32 %v606, %v675
  %v677 = vpop.f32.mrb[0].mxu0
  %678 = vmatprep.mubr.bf16.mxu0 0
  %679 = vmatmul.mubr.bf16.gmra.mrb[0].mxu0 %v636
  %v680 = vpop.f32.mrb[0].mxu0
  %v681 = vadd.f32 %v606, %v680
  %v682 = vpop.f32.mrb[0].mxu0
  %v683 = vpop.f32.mrb[0].mxu0
  %v684 = vadd.f32 %v606, %v683
  %v685 = vpop.f32.mrb[0].mxu0
  %686 = vdwg.mxu0
  %v687 = vmax.f32 %v673, 0.0
  %v688 = vmax.f32 %v676, 0.0
  %v689 = vmax.f32 %v681, 0.0
  %v690 = vmax.f32 %v684, 0.0
  %v691 = vpack.c.bf16 %v688, %v687
  %v692 = vpack.c.bf16 %v690, %v689
  %v693 = vld [vmem:[%s14] sm:$0xf]
  %v694 = vld [vmem:[%s14 + $0x4] sm:$0xf]
  %v695 = vld [vmem:[%s14 + $0x8] sm:$0xf]
  %v696 = vld [vmem:[%s14 + $0xc] sm:$0xf]
  %v697 = vld [vmem:[%s15] sm:$0x1]
  %v699 = vlaneseq
  %v700 = vshrl.u32 %v699, 7
  %v701 = vsub.s32 0, %v700
  %v702 = vrot.slane %v697, %v701
  %v708 = vunpack.c.l.b16 %v693
  %v709 = vunpack.c.l.b16 %v694
  %v710 = vunpack.c.l.b16 %v695
  %v711 = vunpack.c.l.b16 %v696
  %v712 = vpack.c.b16 %v709, %v708
  %v713 = vpack.c.b16 %v711, %v710
  %v717 = vsel %vm348, %v691, 0
  %v720 = vsel %vm348, %v692, 0
  %722 = vmatprep.subr.bf16.mxu0 0
  %723 = vmatpush1.bf16.msra.mxu0 %v712
  %724 = vmatprep.subr.bf16.mxu0 0
  %725 = vmatpush1.bf16.msra.mxu0 %v713
  %726 = vmatprep.subr.bf16.mxu0 0
  %727 = vmatpush1.bf16.msra.mxu0 0
  %728 = vmatprep.subr.bf16.mxu0 0
  %729 = vmatpush1.bf16.msra.mxu0 0
  %730 = vmatprep.subr.bf16.mxu0 0
  %731 = vmatpush1.bf16.msra.mxu0 0
  %732 = vmatprep.subr.bf16.mxu0 0
  %733 = vmatpush1.bf16.msra.mxu0 0
  %734 = vmatprep.subr.bf16.mxu0 0
  %735 = vmatpush1.bf16.msra.mxu0 0
  %736 = vmatprep.subr.bf16.mxu0 0
  %737 = vmatpush1.bf16.msra.mxu0 0
  %738 = vmatprep.subr.bf16.mxu0 0
  %739 = vmatpush1.bf16.msra.mxu0 0
  %740 = vmatprep.subr.bf16.mxu0 0
  %741 = vmatpush1.bf16.msra.mxu0 0
  %742 = vmatprep.subr.bf16.mxu0 0
  %743 = vmatpush1.bf16.msra.mxu0 0
  %744 = vmatprep.subr.bf16.mxu0 0
  %745 = vmatpush1.bf16.msra.mxu0 0
  %746 = vmatprep.subr.bf16.mxu0 0
  %747 = vmatpush1.bf16.msra.mxu0 0
  %748 = vmatprep.subr.bf16.mxu0 0
  %749 = vmatpush1.bf16.msra.mxu0 0
  %750 = vmatprep.subr.bf16.mxu0 0
  %751 = vmatpush1.bf16.msra.mxu0 0
  %752 = vmatprep.subr.bf16.mxu0 0
  %753 = vmatpush1.bf16.msra.mxu0 0
  %754 = vmatprep.mubr.bf16.mxu0 0
  %755 = vmatmul.mubr.bf16.gmra.mrb[0].mxu0 %v717
  %v756 = vpop.f32.mrb[0].mxu0
  %v757 = vadd.f32 %v702, %v756
  %v758 = vpop.f32.mrb[0].mxu0
  %v759 = vpop.f32.mrb[0].mxu0
  %v760 = vadd.f32 %v702, %v759
  %v761 = vpop.f32.mrb[0].mxu0
  %762 = vmatprep.mubr.bf16.mxu0 0
  %763 = vmatmul.mubr.bf16.gmra.mrb[0].mxu0 %v720
  %v764 = vpop.f32.mrb[0].mxu0
  %v765 = vadd.f32 %v702, %v764
  %v766 = vpop.f32.mrb[0].mxu0
  %v767 = vpop.f32.mrb[0].mxu0
  %v768 = vadd.f32 %v702, %v767
  %v769 = vpop.f32.mrb[0].mxu0
  %770 = vdwg.mxu0
  %771 = vst [vmem:[%s16] sm:$0xff] %v757
  %772 = vst [vmem:[%s16 + $0x8] sm:$0xff] %v760
  %773 = vst [vmem:[%s16 + $0x10] sm:$0xff] %v765
  %774 = vst [vmem:[%s16 + $0x18] sm:$0xff] %v768
  // Predicated region
  $region66: #{subfold_pallas.1} parent=0 // pred_check
    _
  $region67: #{subfold_pallas.1} parent=0 // pred_check_branch
    %776 = sbr.rel (0) target = $region69
  $region68: #{subfold_pallas.1} parent=0 // pred_region
    _
  $region69: #{subfold_pallas.1} parent=0 // pred_fallthru
    _
  // Predicated region
  $region70: #{subfold_pallas.1} parent=0 // pred_check
    _
  $region71: #{subfold_pallas.1} parent=0 // pred_check_branch
    %778 = sbr.rel (0) target = $region73
  $region72: #{subfold_pallas.1} parent=0 // pred_region
    _
  $region73: #{subfold_pallas.1} parent=0 // pred_fallthru
    _

</llo_original>
